<compile_context>
chip_gen: v5e
topology: v5e:2x2
jax: 0.10.0
libtpu: 0.0.40
codegen_flags: <defaults>
</compile_context>

<pallas_src>
import functools
import math

import jax
import jax.numpy as jnp
from jax.experimental import pallas as pl
from jax.experimental.pallas import tpu as pltpu

LANE = 128


def _cdiv(a, b):
    return -(-a // b)


def _round_up(x, m):
    return _cdiv(x, m) * m


def _vmem_limit(bytes_needed):
    # 2x headroom for in-kernel temporaries; clamp to a safe range.
    return int(min(max(2 * bytes_needed, 32 * 1024 * 1024), 100 * 1024 * 1024))


# ----------------------------- FFN kernel ---------------------------------


def ffn_kernel(x_ref, w1_ref, b1_ref, w2_ref, b2_ref, o_ref):
    # x is raw f32 (tile_m, d_in); cast to bf16 in-register (free on VPU).
    x = x_ref[...].astype(jnp.bfloat16)
    h = jnp.dot(x, w1_ref[...], preferred_element_type=jnp.float32) + b1_ref[...]
    h = jnp.maximum(h, 0.0)
    y = (jnp.dot(h.astype(jnp.bfloat16), w2_ref[...],
                 preferred_element_type=jnp.float32) + b2_ref[...])
    o_ref[...] = y.astype(jnp.bfloat16)              # bf16 HBM intermediate


def ffn_forward(x2d, w1, b1, w2, b2, *, tile_m):
    n, d_in = x2d.shape
    d_p = w1.shape[1]
    assert n % tile_m == 0

    # VMEM budget: double-buffered x/out blocks + (constant-index) weights.
    # TODO(synk): at production d_hid, put pipeline_mode=pl.Buffered(1) on the
    # constant-index weight specs to avoid double-buffering them.
    bytes_needed = (2 * (tile_m * d_in * 4 + tile_m * d_p * 2)
                    + 2 * (d_in * d_p * 2 + d_p * d_p * 2 + 2 * d_p * 4))

    return pl.pallas_call(
        ffn_kernel,
        out_shape=jax.ShapeDtypeStruct((n, d_p), jnp.bfloat16),
        grid_spec=pltpu.PrefetchScalarGridSpec(
            num_scalar_prefetch=0,
            grid=(n // tile_m,),
            in_specs=[
                pl.BlockSpec((tile_m, d_in), lambda i: (i, 0)),
                pl.BlockSpec((d_in, d_p), lambda i: (0, 0)),
                pl.BlockSpec((1, d_p), lambda i: (0, 0)),
                pl.BlockSpec((d_p, d_p), lambda i: (0, 0)),
                pl.BlockSpec((1, d_p), lambda i: (0, 0)),
            ],
            out_specs=pl.BlockSpec((tile_m, d_p), lambda i: (i, 0)),
        ),
        compiler_params=pltpu.CompilerParams(
            dimension_semantics=("parallel",),
            vmem_limit_bytes=_vmem_limit(bytes_needed)),
    )(x2d, w1, b1, w2, b2)


def _choose_tile_m(n_tok, max_tile=512, min_steps=4):
    """Row tile with >=min_steps grid steps and < tile_m padded rows."""
    steps = max(min_steps, _cdiv(n_tok, max_tile))
    tile = min(max_tile, _round_up(_cdiv(n_tok, steps), 8))
    n_pad = tile * _cdiv(n_tok, tile)
    return tile, n_pad


# ----------------- Fused dual-attention + combine kernel -------------------
#
# Grid = (B,).  Per step (one batch): full-width Q/K/V projections for both
# branches (NN matmuls, pre-transposed weights), then a statically unrolled
# head loop for score/softmax/PV, per-head output projection accumulation,
# alpha-combine and residual.  All feature dims are lane-dense (Dp = k*128).


def attn_combine_kernel(q_ref, pkv_ref, nkv_ref, wqkv_ref, bqkv_ref, wo_ref,
                        bo_ref, o_ref, *, scale, alpha, num_heads, hd_p):
    q_bf = q_ref[0]                                    # (Lq, Dp) bf16

    def one_branch(kv_ref, br):
        kv_bf = kv_ref[0]                              # (Lkv, Dp) bf16
        # Full-width NN projections on the MXU, f32 accumulation.
        q_proj = jnp.dot(q_bf, wqkv_ref[br, 0],
                         preferred_element_type=jnp.float32) + bqkv_ref[br, 0]
        k_proj = jnp.dot(kv_bf, wqkv_ref[br, 1],
                         preferred_element_type=jnp.float32) + bqkv_ref[br, 1]
        v_proj = jnp.dot(kv_bf, wqkv_ref[br, 2],
                         preferred_element_type=jnp.float32) + bqkv_ref[br, 2]
        wo_b = wo_ref[br]                              # (Dp, Dp) bf16

        acc = None
        for h in range(num_heads):                     # static unroll
            lo, hi = h * hd_p, (h + 1) * hd_p
            qh = q_proj[:, lo:hi].astype(jnp.bfloat16)   # (Lq,  hd_p)
            kh = k_proj[:, lo:hi].astype(jnp.bfloat16)   # (Lkv, hd_p)
            vh = v_proj[:, lo:hi].astype(jnp.bfloat16)   # (Lkv, hd_p)
            # q @ k^T — the only NT matmul in the kernel.
            s = jax.lax.dot_general(
                qh, kh, (((1,), (1,)), ((), ())),
                preferred_element_type=jnp.float32) * scale
            s = s - jnp.max(s, axis=-1, keepdims=True)
            p = jnp.exp(s)
            p = p * pl.reciprocal(jnp.sum(p, axis=-1, keepdims=True),
                                  approx=True)
            oh = jnp.dot(p.astype(jnp.bfloat16), vh,
                         preferred_element_type=jnp.float32)          # (Lq, hd_p)
            contrib = jnp.dot(oh.astype(jnp.bfloat16), wo_b[lo:hi, :],
                              preferred_element_type=jnp.float32)     # (Lq, Dp)
            acc = contrib if acc is None else acc + contrib
        return acc

    pos_o = one_branch(pkv_ref, 0)
    neg_o = one_branch(nkv_ref, 1)
    o_ref[0] = (q_bf.astype(jnp.float32) + bo_ref[...]
                + alpha * pos_o + (1.0 - alpha) * neg_o)


def attn_combine_forward(q, pkv, nkv, wqkv, bqkv, wo, bo, *, num_heads,
                         head_dim, alpha):
    B, Lq, Dp = q.shape
    Lkv = pkv.shape[1]
    assert Dp % num_heads == 0
    hd_p = Dp // num_heads

    kernel = functools.partial(attn_combine_kernel,
                               scale=1.0 / math.sqrt(head_dim), alpha=alpha,
                               num_heads=num_heads, hd_p=hd_p)

    q_spec = pl.BlockSpec((1, Lq, Dp), lambda b: (b, 0, 0))
    kv_spec = pl.BlockSpec((1, Lkv, Dp), lambda b: (b, 0, 0))

    def const_spec(arr):
        # Full-extent block, constant index -> DMA'd once, stays VMEM-resident.
        return pl.BlockSpec(arr.shape, lambda b: (0,) * arr.ndim)

    bytes_needed = (
        2 * sum(a.size * a.dtype.itemsize for a in (wqkv, bqkv, wo, bo))
        + 2 * (Lq * Dp * 2 + 2 * Lkv * Dp * 2 + Lq * Dp * 4))

    return pl.pallas_call(
        kernel,
        out_shape=jax.ShapeDtypeStruct((B, Lq, Dp), jnp.float32),
        grid_spec=pltpu.PrefetchScalarGridSpec(
            num_scalar_prefetch=0,
            grid=(B,),   # parallel axis with >=2 steps keeps both v7x TCs busy
            in_specs=[q_spec, kv_spec, kv_spec,
                      const_spec(wqkv), const_spec(bqkv),
                      const_spec(wo), const_spec(bo)],
            out_specs=q_spec,
        ),
        compiler_params=pltpu.CompilerParams(
            dimension_semantics=("parallel",),
            vmem_limit_bytes=_vmem_limit(bytes_needed)),
    )(q, pkv, nkv, wqkv, bqkv, wo, bo)


# ----------------------- Parameter preparation -----------------------------


def prepare_kernel_params(params, d_in, d_hid, num_heads, alpha):
    """Pre-transpose all weights to (K, N) NN layout, pad the embedding dim to
    a lane-dense multiple of 128 with head-blocked packing, pre-cast matmul
    weights to bf16 (biases stay f32), pack per-branch tensors together."""
    d_p = _round_up(d_hid, LANE)
    assert d_hid % num_heads == 0 and d_p % num_heads == 0
    hd = d_hid // num_heads
    hd_p = d_p // num_heads
    assert hd_p % 8 == 0

    def pad_nn(w, rows, cols, dtype):          # w already (K, N)-oriented
        out = jnp.zeros((rows, cols), jnp.float32)
        out = out.at[:w.shape[0], :w.shape[1]].set(w)
        return out.astype(dtype)

    def qkv_pack(w):        # torch (out,in), y = x@w.T  ->  (d_p,d_p) NN,
        wt = w.T.reshape(d_hid, num_heads, hd)    # head-blocked columns
        wp = jnp.zeros((d_p, num_heads, hd_p), jnp.float32)
        wp = wp.at[:d_hid, :, :hd].set(wt)
        return wp.reshape(d_p, d_p).astype(jnp.bfloat16)

    def qkv_bias(b):        # (1, d_hid) -> (1, d_p), head-blocked
        br = b[0].reshape(num_heads, hd)
        bp = jnp.zeros((num_heads, hd_p), jnp.float32).at[:, :hd].set(br)
        return bp.reshape(1, d_p)

    def out_pack(w):        # out-proj: (d_p,d_p) NN, head-blocked rows
        wt = w.T.reshape(num_heads, hd, d_hid)
        wp = jnp.zeros((num_heads, hd_p, d_p), jnp.float32)
        wp = wp.at[:, :hd, :d_hid].set(wt)
        return wp.reshape(d_p, d_p).astype(jnp.bfloat16)

    pos, neg = params["pos"], params["neg"]
    wqkv = jnp.stack([
        jnp.stack([qkv_pack(pos["wq"]), qkv_pack(pos["wk"]), qkv_pack(pos["wv"])]),
        jnp.stack([qkv_pack(neg["wq"]), qkv_pack(neg["wk"]), qkv_pack(neg["wv"])]),
    ])                                                     # (2,3,d_p,d_p) bf16
    bqkv = jnp.stack([
        jnp.stack([qkv_bias(pos["bq"]), qkv_bias(pos["bk"]), qkv_bias(pos["bv"])]),
        jnp.stack([qkv_bias(neg["bq"]), qkv_bias(neg["bk"]), qkv_bias(neg["bv"])]),
    ])                                                     # (2,3,1,d_p) f32
    wo = jnp.stack([out_pack(pos["wo"]), out_pack(neg["wo"])])  # (2,d_p,d_p)
    # Output biases enter linearly -> pre-combine alpha*bo_pos+(1-alpha)*bo_neg.
    bo = pad_nn(alpha * pos["bo"] + (1.0 - alpha) * neg["bo"], 1, d_p,
                jnp.float32)

    return dict(
        d_p=d_p,
        ffn_w1=pad_nn(params["ffn_w1"].T, d_in, d_p, jnp.bfloat16),  # (d_in,d_p)
        ffn_b1=pad_nn(params["ffn_b1"], 1, d_p, jnp.float32),
        ffn_w2=pad_nn(params["ffn_w2"].T, d_p, d_p, jnp.bfloat16),   # (d_p,d_p)
        ffn_b2=pad_nn(params["ffn_b2"], 1, d_p, jnp.float32),
        wqkv=wqkv, bqkv=bqkv, wo=wo, bo=bo,
    )


# ----------------------- ModalityExpert forward ----------------------------


def modality_expert_forward(params, query, pos, neg, *, num_heads, alpha):
    B, Lq, d_in = query.shape
    _, N, L, _ = pos.shape
    d_hid = params["ffn_w1"].shape[0]

    kp = prepare_kernel_params(params, d_in, d_hid, num_heads, alpha)
    d_p = kp["d_p"]

    # --- single merged FFN launch over all tokens (query + pos + neg) ---
    nq, nk = B * Lq, B * N * L
    n_tok = nq + 2 * nk
    tile_m, n_pad = _choose_tile_m(n_tok)
    parts = [query.reshape(nq, d_in), pos.reshape(nk, d_in),
             neg.reshape(nk, d_in)]
    if n_pad > n_tok:
        parts.append(jnp.zeros((n_pad - n_tok, d_in), query.dtype))
    x_all = jnp.concatenate(parts, axis=0)          # (n_pad, d_in) f32, no lane pad

    y = ffn_forward(x_all, kp["ffn_w1"], kp["ffn_b1"],
                    kp["ffn_w2"], kp["ffn_b2"], tile_m=tile_m)   # bf16
    q = y[:nq].reshape(B, Lq, d_p)
    p = y[nq:nq + nk].reshape(B, N * L, d_p)        # 'b n l d -> b (n l) d'
    n_ = y[nq + nk:nq + 2 * nk].reshape(B, N * L, d_p)

    # --- fused pos-attn + neg-attn + alpha-combine + residual ---
    out = attn_combine_forward(q, p, n_, kp["wqkv"], kp["bqkv"], kp["wo"],
                               kp["bo"], num_heads=num_heads,
                               head_dim=d_hid // num_heads, alpha=alpha)
    return out[:, :, :d_hid]


# ---------------------------- Parameter init -------------------------------


def init_params(key, d_in, d_hid):
    ks = jax.random.split(key, 6)

    def w(k, o, i):
        b = 1.0 / math.sqrt(i)
        return jax.random.uniform(k, (o, i), jnp.float32, -b, b)

    def bvec(k, o, i):
        b = 1.0 / math.sqrt(i)
        return jax.random.uniform(k, (1, o), jnp.float32, -b, b)

    def attn_params(k):
        kk = jax.random.split(k, 8)
        return dict(
            wq=w(kk[0], d_hid, d_hid), wk=w(kk[1], d_hid, d_hid),
            wv=w(kk[2], d_hid, d_hid),
            bq=bvec(kk[3], d_hid, d_hid), bk=bvec(kk[4], d_hid, d_hid),
            bv=bvec(kk[5], d_hid, d_hid),
            wo=w(kk[6], d_hid, d_hid), bo=bvec(kk[7], d_hid, d_hid),
        )

    return dict(
        ffn_w1=w(ks[0], d_hid, d_in), ffn_b1=bvec(ks[1], d_hid, d_in),
        ffn_w2=w(ks[2], d_hid, d_hid), ffn_b2=bvec(ks[3], d_hid, d_hid),
        pos=attn_params(ks[4]), neg=attn_params(ks[5]),
    )


# --------------------------- Pure-JAX reference ----------------------------


def reference(params, query, pos, neg, num_heads, alpha):
    with jax.default_matmul_precision("float32"):
        def ffn(x):
            h = jnp.maximum(x @ params["ffn_w1"].T + params["ffn_b1"][0], 0.0)
            return h @ params["ffn_w2"].T + params["ffn_b2"][0]

        def mha(q, kv, p):
            B, Lq, D = q.shape
            hd = D // num_heads
            Q = q @ p["wq"].T + p["bq"][0]
            K = kv @ p["wk"].T + p["bk"][0]
            V = kv @ p["wv"].T + p["bv"][0]
            Qh = Q.reshape(B, Lq, num_heads, hd).transpose(0, 2, 1, 3)
            Kh = K.reshape(B, -1, num_heads, hd).transpose(0, 2, 1, 3)
            Vh = V.reshape(B, -1, num_heads, hd).transpose(0, 2, 1, 3)
            s = jnp.einsum("bhqd,bhkd->bhqk", Qh, Kh) / math.sqrt(hd)
            a = jax.nn.softmax(s, axis=-1)
            o = jnp.einsum("bhqk,bhkd->bhqd", a, Vh)
            o = o.transpose(0, 2, 1, 3).reshape(B, Lq, D)
            return o @ p["wo"].T + p["bo"][0]

        q = ffn(query)
        B = query.shape[0]
        pf = ffn(pos).reshape(B, -1, q.shape[-1])
        nf = ffn(neg).reshape(B, -1, q.shape[-1])
        return (alpha * mha(q, pf, params["pos"])
                + (1.0 - alpha) * mha(q, nf, params["neg"]) + q)


# -------------------------------- Main --------------------------------------


if __name__ == "__main__":
    B, Lq, N, L = 2, 8, 2, 8
    D_IN, D = 32, 32
    NUM_HEADS = 4
    ALPHA = 0.6

    key = jax.random.PRNGKey(0)
    k1, k2, k3, kparam = jax.random.split(key, 4)
    query = jax.random.normal(k1, (B, Lq, D_IN), jnp.float32)
    pos = jax.random.normal(k2, (B, N, L, D_IN), jnp.float32)
    neg = jax.random.normal(k3, (B, N, L, D_IN), jnp.float32)
    params = init_params(kparam, D_IN, D)

    out = modality_expert_forward(params, query, pos, neg,
                                  num_heads=NUM_HEADS, alpha=ALPHA)
    out = jax.block_until_ready(out)

    ref = reference(params, query, pos, neg, NUM_HEADS, ALPHA)
    assert out.shape == (B, Lq, D), out.shape
    # bf16 MXU operands + bf16 FFN intermediate (f32 accumulation) -> looser tol.
    assert jnp.allclose(out, ref, atol=4e-2, rtol=4e-2), float(
        jnp.max(jnp.abs(out - ref)))

    print("KERNEL_OK")
</pallas_src>

<mosaic_0001>
module attributes {stable_mosaic.version = 11 : i64} {
  func.func @ffn_kernel(%arg0: i32, %arg1: memref<24x32xf32, #tpu.memory_space<vmem>>, %arg2: memref<32x128xbf16, #tpu.memory_space<vmem>>, %arg3: memref<1x128xf32, #tpu.memory_space<vmem>>, %arg4: memref<128x128xbf16, #tpu.memory_space<vmem>>, %arg5: memref<1x128xf32, #tpu.memory_space<vmem>>, %arg6: memref<24x128xbf16, #tpu.memory_space<vmem>>) attributes {dimension_semantics = [#tpu.dimension_semantics<parallel>], iteration_bounds = array<i64: 4>, scalar_prefetch = 0 : i64, scratch_operands = 0 : i64, tpu.core_type = #tpu.core_type<tc>, window_params = [{transform_indices = @transform_0, window_bounds = array<i64: 24, 32>}, {pipeline_mode = #tpu.pipeline_mode<synchronous>, transform_indices = @transform_1, window_bounds = array<i64: 32, 128>}, {pipeline_mode = #tpu.pipeline_mode<synchronous>, transform_indices = @transform_2, window_bounds = array<i64: 1, 128>}, {pipeline_mode = #tpu.pipeline_mode<synchronous>, transform_indices = @transform_3, window_bounds = array<i64: 128, 128>}, {pipeline_mode = #tpu.pipeline_mode<synchronous>, transform_indices = @transform_4, window_bounds = array<i64: 1, 128>}, {transform_indices = @transform_5, window_bounds = array<i64: 24, 128>}]} {
    %c0 = arith.constant 0 : index
    %c0_0 = arith.constant 0 : index
    %0 = vector.load %arg1[%c0, %c0_0] : memref<24x32xf32, #tpu.memory_space<vmem>>, vector<24x32xf32>
    %1 = arith.truncf %0 : vector<24x32xf32> to vector<24x32xbf16>
    %c0_1 = arith.constant 0 : index
    %c0_2 = arith.constant 0 : index
    %2 = vector.load %arg2[%c0_1, %c0_2] : memref<32x128xbf16, #tpu.memory_space<vmem>>, vector<32x128xbf16>
    %cst = arith.constant dense<0.000000e+00> : vector<24x128xf32>
    %3 = tpu.matmul %1, %2, %cst {dimension_numbers = #tpu.dot_dimension_numbers<[1], [0], [0], [1], [0, 0, 1, 1], [], []>} : vector<24x32xbf16>, vector<32x128xbf16>, vector<24x128xf32> -> vector<24x128xf32>
    %c0_3 = arith.constant 0 : index
    %c0_4 = arith.constant 0 : index
    %4 = vector.load %arg3[%c0_3, %c0_4] : memref<1x128xf32, #tpu.memory_space<vmem>>, vector<1x128xf32>
    %5 = vector.broadcast %4 : vector<1x128xf32> to vector<24x128xf32>
    %6 = arith.addf %3, %5 : vector<24x128xf32>
    %cst_5 = arith.constant 0.000000e+00 : f32
    %7 = vector.broadcast %cst_5 : f32 to vector<24x128xf32>
    %8 = arith.maximumf %6, %7 : vector<24x128xf32>
    %9 = arith.truncf %8 : vector<24x128xf32> to vector<24x128xbf16>
    %c0_6 = arith.constant 0 : index
    %c0_7 = arith.constant 0 : index
    %10 = vector.load %arg4[%c0_6, %c0_7] : memref<128x128xbf16, #tpu.memory_space<vmem>>, vector<128x128xbf16>
    %cst_8 = arith.constant dense<0.000000e+00> : vector<24x128xf32>
    %11 = tpu.matmul %9, %10, %cst_8 {dimension_numbers = #tpu.dot_dimension_numbers<[1], [0], [0], [1], [0, 0, 1, 1], [], []>} : vector<24x128xbf16>, vector<128x128xbf16>, vector<24x128xf32> -> vector<24x128xf32>
    %c0_9 = arith.constant 0 : index
    %c0_10 = arith.constant 0 : index
    %12 = vector.load %arg5[%c0_9, %c0_10] : memref<1x128xf32, #tpu.memory_space<vmem>>, vector<1x128xf32>
    %13 = vector.broadcast %12 : vector<1x128xf32> to vector<24x128xf32>
    %14 = arith.addf %11, %13 : vector<24x128xf32>
    %15 = arith.truncf %14 : vector<24x128xf32> to vector<24x128xbf16>
    %c0_11 = arith.constant 0 : index
    %c0_12 = arith.constant 0 : index
    %16 = vector.load %arg6[%c0_11, %c0_12] : memref<24x128xbf16, #tpu.memory_space<vmem>>, vector<24x128xbf16>
    tpu.vector_store %arg6[%c0_11, %c0_12], %15 {strides = array<i32>} : memref<24x128xbf16, #tpu.memory_space<vmem>>, vector<24x128xbf16>,
    return
  }
  func.func @transform_0(%arg0: i32) -> (i32, i32) {
    %c0_i32 = arith.constant 0 : i32
    %c0_i32_0 = arith.constant 0 : i32
    return %arg0, %c0_i32 : i32, i32
  }
  func.func @transform_1(%arg0: i32) -> (i32, i32) {
    %c0_i32 = arith.constant 0 : i32
    %c0_i32_0 = arith.constant 0 : i32
    %c0_i32_1 = arith.constant 0 : i32
    return %c0_i32, %c0_i32_0 : i32, i32
  }
  func.func @transform_2(%arg0: i32) -> (i32, i32) {
    %c0_i32 = arith.constant 0 : i32
    %c0_i32_0 = arith.constant 0 : i32
    %c0_i32_1 = arith.constant 0 : i32
    return %c0_i32, %c0_i32_0 : i32, i32
  }
  func.func @transform_3(%arg0: i32) -> (i32, i32) {
    %c0_i32 = arith.constant 0 : i32
    %c0_i32_0 = arith.constant 0 : i32
    %c0_i32_1 = arith.constant 0 : i32
    return %c0_i32, %c0_i32_0 : i32, i32
  }
  func.func @transform_4(%arg0: i32) -> (i32, i32) {
    %c0_i32 = arith.constant 0 : i32
    %c0_i32_0 = arith.constant 0 : i32
    %c0_i32_1 = arith.constant 0 : i32
    return %c0_i32, %c0_i32_0 : i32, i32
  }
  func.func @transform_5(%arg0: i32) -> (i32, i32) {
    %c0_i32 = arith.constant 0 : i32
    %c0_i32_0 = arith.constant 0 : i32
    return %arg0, %c0_i32 : i32, i32
  }
}

</mosaic_0001>

<llo_original>
// kernel: tpu_custom_call.1
$region0: #{tpu_custom_call.1}
  #allocation0 [shape = 'u32[]', space=smem, size = 0x4, offset = 0x4, fixed_abs, tag = 'smem constant byte address 0x4 - core index']
  #allocation1 [shape = 'u32[72,128]{1,0:T(1,128)}', space=vmem, size = 0x9000, scoped, tag = 'internal scratch']
  %s0 = inlined_call_operand.vmem [shape: f32[96,32], index: 0, kind: input, shape index: {}]
  %s1 = inlined_call_operand.vmem [shape: bf16[32,128], index: 1, kind: input, shape index: {}]
  %s2 = inlined_call_operand.vmem [shape: f32[1,128], index: 2, kind: input, shape index: {}]
  %s3 = inlined_call_operand.vmem [shape: bf16[128,128], index: 3, kind: input, shape index: {}]
  %s4 = inlined_call_operand.vmem [shape: f32[1,128], index: 4, kind: input, shape index: {}]
  %s5 = inlined_call_operand.hbm [shape: bf16[96,128], index: 5, kind: output, shape index: {}]
  %s6 = sld [smem:[#allocation0]]
  $region53: #{tpu_custom_call.1} parent=0
    _
  %s8 = ssub.s32 1, %s6
  %s9 = scalar_select 0, %s8, %s6
  $region1: #{tpu_custom_call.1} parent=0
    #allocation2 [shape = 'u8[12288]{0}', space=vmem, size = 0x3000, scoped, tag = 'output window, operand 0']
    #allocation3 [shape = 's32[2]{0}', space=sflag, size = 0x8, scoped, tag = 'scoped memory for tpu_custom_call.1']
    %10 = vsyncpa [#allocation3], 0
    %s11 = scalar_lea.sflag [#allocation3], 1
    %12 = vsyncpa %s11, 0
    loop: start=0, step=1, limit=6
    $region2: #{tpu_custom_call.1} parent=1 // loop_pre_header
      _
    $region3: #{tpu_custom_call.1} parent=1 // loop_header
      %s14 = sphi 0, %s18
      %p15 = scmp.ge.s32.totalorder %s14, 6
      %s24 = sphi 0, %s26
      %s27 = sphi 0, %s24
      %s28 = sphi 0, %s27
      %s44 = sphi 0, %s28
      %s48 = sphi 0, %s48
      %s50 = sphi 0, %s48
      %s51 = sphi 0, %s50
      %s65 = sphi 0, %s51
      %s69 = sphi 0, %s69
      %s71 = sphi 0, %s69
      %s72 = sphi 0, %s71
      %s86 = sphi 0, %s72
      %s90 = sphi 0, %s90
      %s92 = sphi 0, %s90
      %s93 = sphi 0, %s92
      %s107 = sphi 0, %s93
      %s111 = sphi 0, %s111
      %s113 = sphi 0, %s111
      %s114 = sphi 0, %s113
      %s128 = sphi 0, %s114
      %s134 = sphi 0, %s136
      %s137 = sphi 0, %s134
      %s138 = sphi 0, %s137
      %s154 = sphi 0, %s138
    $region4: #{tpu_custom_call.1} parent=1 // loop_header_branch
      %17 = sbr.rel (%p15) target = $region8
    $region5: #{tpu_custom_call.1} parent=1 // loop_body
      %s19 = ssub.s32 %s14, 1
      %s20 = ssub.s32 %s14, 2
      %s21 = sadd.s32 %s14, 1
      %s22 = ssub.s32 %s14, %s21
      %p23 = scmp.eq.s32.totalorder %s22, 0
      %s25 = sadd.s32 %s24, 1
      %s26 = scalar_select %p23, %s24, %s25
      %p29 = pneg %p23
      %p30 = scmp.eq.s32.totalorder %s14, 3
      %p31 = por %p29, %p30
      %p32 = scmp.ne.s32.totalorder %s24, %s27
      %p33 = scmp.eq.s32.totalorder %s14, 0
      %p34 = por %p32, %p33
      %p35 = scmp.ne.s32.totalorder %s24, %s27
      %p36 = scmp.eq.s32.totalorder %s19, 3
      %p37 = por %p35, %p36
      %p38 = scmp.ne.s32.totalorder %s27, %s28
      %p39 = scmp.eq.s32.totalorder %s19, 0
      %p40 = por %p38, %p39
      %p41 = scmp.ne.s32.totalorder %s27, %s28
      %p42 = scmp.eq.s32.totalorder %s20, 3
      %p43 = por %p41, %p42
      %p45 = scmp.ne.s32.totalorder %s28, %s44
      %p46 = scmp.eq.s32.totalorder %s20, 0
      %p47 = por %p45, %p46
      %s49 = sadd.s32 %s48, 1
      %p52 = scmp.eq.s32.totalorder %s14, 3
      %p53 = scmp.ne.s32.totalorder %s48, %s50
      %p54 = scmp.eq.s32.totalorder %s14, 0
      %p55 = por %p53, %p54
      %p56 = scmp.ne.s32.totalorder %s48, %s50
      %p57 = scmp.eq.s32.totalorder %s19, 3
      %p58 = por %p56, %p57
      %p59 = scmp.ne.s32.totalorder %s50, %s51
      %p60 = scmp.eq.s32.totalorder %s19, 0
      %p61 = por %p59, %p60
      %p62 = scmp.ne.s32.totalorder %s50, %s51
      %p63 = scmp.eq.s32.totalorder %s20, 3
      %p64 = por %p62, %p63
      %p66 = scmp.ne.s32.totalorder %s51, %s65
      %p67 = scmp.eq.s32.totalorder %s20, 0
      %p68 = por %p66, %p67
      %s70 = sadd.s32 %s69, 1
      %p73 = scmp.eq.s32.totalorder %s14, 3
      %p74 = scmp.ne.s32.totalorder %s69, %s71
      %p75 = scmp.eq.s32.totalorder %s14, 0
      %p76 = por %p74, %p75
      %p77 = scmp.ne.s32.totalorder %s69, %s71
      %p78 = scmp.eq.s32.totalorder %s19, 3
      %p79 = por %p77, %p78
      %p80 = scmp.ne.s32.totalorder %s71, %s72
      %p81 = scmp.eq.s32.totalorder %s19, 0
      %p82 = por %p80, %p81
      %p83 = scmp.ne.s32.totalorder %s71, %s72
      %p84 = scmp.eq.s32.totalorder %s20, 3
      %p85 = por %p83, %p84
      %p87 = scmp.ne.s32.totalorder %s72, %s86
      %p88 = scmp.eq.s32.totalorder %s20, 0
      %p89 = por %p87, %p88
      %s91 = sadd.s32 %s90, 1
      %p94 = scmp.eq.s32.totalorder %s14, 3
      %p95 = scmp.ne.s32.totalorder %s90, %s92
      %p96 = scmp.eq.s32.totalorder %s14, 0
      %p97 = por %p95, %p96
      %p98 = scmp.ne.s32.totalorder %s90, %s92
      %p99 = scmp.eq.s32.totalorder %s19, 3
      %p100 = por %p98, %p99
      %p101 = scmp.ne.s32.totalorder %s92, %s93
      %p102 = scmp.eq.s32.totalorder %s19, 0
      %p103 = por %p101, %p102
      %p104 = scmp.ne.s32.totalorder %s92, %s93
      %p105 = scmp.eq.s32.totalorder %s20, 3
      %p106 = por %p104, %p105
      %p108 = scmp.ne.s32.totalorder %s93, %s107
      %p109 = scmp.eq.s32.totalorder %s20, 0
      %p110 = por %p108, %p109
      %s112 = sadd.s32 %s111, 1
      %p115 = scmp.eq.s32.totalorder %s14, 3
      %p116 = scmp.ne.s32.totalorder %s111, %s113
      %p117 = scmp.eq.s32.totalorder %s14, 0
      %p118 = por %p116, %p117
      %p119 = scmp.ne.s32.totalorder %s111, %s113
      %p120 = scmp.eq.s32.totalorder %s19, 3
      %p121 = por %p119, %p120
      %p122 = scmp.ne.s32.totalorder %s113, %s114
      %p123 = scmp.eq.s32.totalorder %s19, 0
      %p124 = por %p122, %p123
      %p125 = scmp.ne.s32.totalorder %s113, %s114
      %p126 = scmp.eq.s32.totalorder %s20, 3
      %p127 = por %p125, %p126
      %p129 = scmp.ne.s32.totalorder %s114, %s128
      %p130 = scmp.eq.s32.totalorder %s20, 0
      %p131 = por %p129, %p130
      %s132 = ssub.s32 %s14, %s21
      %p133 = scmp.eq.s32.totalorder %s132, 0
      %s135 = sadd.s32 %s134, 1
      %s136 = scalar_select %p133, %s134, %s135
      %p139 = pneg %p133
      %p140 = scmp.eq.s32.totalorder %s14, 3
      %p141 = por %p139, %p140
      %p142 = scmp.ne.s32.totalorder %s134, %s137
      %p143 = scmp.eq.s32.totalorder %s14, 0
      %p144 = por %p142, %p143
      %p145 = scmp.ne.s32.totalorder %s134, %s137
      %p146 = scmp.eq.s32.totalorder %s19, 3
      %p147 = por %p145, %p146
      %p148 = scmp.ne.s32.totalorder %s137, %s138
      %p149 = scmp.eq.s32.totalorder %s19, 0
      %p150 = por %p148, %p149
      %p151 = scmp.ne.s32.totalorder %s137, %s138
      %p152 = scmp.eq.s32.totalorder %s20, 3
      %p153 = por %p151, %p152
      %p155 = scmp.ne.s32.totalorder %s138, %s154
      %p156 = scmp.eq.s32.totalorder %s20, 0
      %p157 = por %p155, %p156
      %p158 = scmp.le.s32.totalorder 1, %s14
      %p159 = scmp.lt.s32.totalorder %s14, 5
      %p160 = pnand %p158, %p159
      %p161 = pneg %p160
      // Predicated region
      $region9: #{tpu_custom_call.1} parent=5 // pred_check
        _
      $region10: #{tpu_custom_call.1} parent=5 // pred_check_branch
        %163 = sbr.rel (%p160) target = $region12
      $region11: #{tpu_custom_call.1} parent=5 // pred_region
        %s164 = ssub.s32 %s14, 1
        // Predicated region
        $region13: #{tpu_custom_call.1} parent=11 // pred_check
          %p165 = pneg %p61
        $region14: #{tpu_custom_call.1} parent=11 // pred_check_branch
          %167 = sbr.rel (%p165) target = $region16
        $region15: #{tpu_custom_call.1} parent=11 // pred_region
          _
        $region16: #{tpu_custom_call.1} parent=11 // pred_fallthru
          _
        // Predicated region
        $region17: #{tpu_custom_call.1} parent=11 // pred_check
          %p168 = pneg %p82
        $region18: #{tpu_custom_call.1} parent=11 // pred_check_branch
          %170 = sbr.rel (%p168) target = $region20
        $region19: #{tpu_custom_call.1} parent=11 // pred_region
          _
        $region20: #{tpu_custom_call.1} parent=11 // pred_fallthru
          _
        // Predicated region
        $region21: #{tpu_custom_call.1} parent=11 // pred_check
          %p171 = pneg %p103
        $region22: #{tpu_custom_call.1} parent=11 // pred_check_branch
          %173 = sbr.rel (%p171) target = $region24
        $region23: #{tpu_custom_call.1} parent=11 // pred_region
          _
        $region24: #{tpu_custom_call.1} parent=11 // pred_fallthru
          _
        // Predicated region
        $region25: #{tpu_custom_call.1} parent=11 // pred_check
          %p174 = pneg %p124
        $region26: #{tpu_custom_call.1} parent=11 // pred_check_branch
          %176 = sbr.rel (%p174) target = $region28
        $region27: #{tpu_custom_call.1} parent=11 // pred_region
          _
        $region28: #{tpu_custom_call.1} parent=11 // pred_fallthru
          _
      $region12: #{tpu_custom_call.1} parent=5 // pred_fallthru
        _
      %p177 = scmp.lt.s32.totalorder %s14, 4
      // Predicated region
      $region29: #{tpu_custom_call.1} parent=5 // pred_check
        %p178 = pneg %p177
      $region30: #{tpu_custom_call.1} parent=5 // pred_check_branch
        %180 = sbr.rel (%p178) target = $region32
      $region31: #{tpu_custom_call.1} parent=5 // pred_region
        // Predicated region
        $region33: #{tpu_custom_call.1} parent=31 // pred_check
          %p181 = pneg %p34
        $region34: #{tpu_custom_call.1} parent=31 // pred_check_branch
          %183 = sbr.rel (%p181) target = $region36
        $region35: #{tpu_custom_call.1} parent=31 // pred_region
          %s184 = smul.u32 3, %s14
          %p185 = scmp.lt.s32.totalorder %s184, 11
          %s186 = scalar_select %p185, %s184, 11
          %s187 = smul.addr %s186, 8
          %s188 = scalar_lea.vmem %s0, %s187
          %s189 = smul.u32 3, %s14
        $region36: #{tpu_custom_call.1} parent=31 // pred_fallthru
          _
      $region32: #{tpu_custom_call.1} parent=5 // pred_fallthru
        _
      %p190 = scmp.le.s32.totalorder 1, %s14
      %p191 = scmp.lt.s32.totalorder %s14, 5
      %p192 = pnand %p190, %p191
      %p193 = pneg %p192
      // Predicated region
      $region37: #{tpu_custom_call.1} parent=5 // pred_check
        _
      $region38: #{tpu_custom_call.1} parent=5 // pred_check_branch
        %195 = sbr.rel (%p192) target = $region40
      $region39: #{tpu_custom_call.1} parent=5 // pred_region
        %s196 = ssub.s32 %s14, 1
        %s197 = smul.u32 3, %s19
        %p198 = scmp.lt.s32.totalorder %s197, 11
        %s199 = scalar_select %p198, %s197, 11
        %s200 = smul.addr %s199, 8
        %s201 = scalar_lea.vmem %s0, %s200
        %p202 = pneg %p40
        %p203 = pneg %p37
        %p204 = pneg %p61
        %p205 = pneg %p58
        %p206 = pneg %p82
        %p207 = pneg %p79
        %p208 = pneg %p103
        %p209 = pneg %p100
        %p210 = pneg %p124
        %p211 = pneg %p121
        %p212 = pneg %p150
        %p213 = pneg %p147
        %s214 = sand.u32 %s137, 1
        %s215 = scalar_lea.sflag [#allocation3], %s214
        %s216 = sand.u32 %s137, 1
        %s217 = smul.addr %s216, 12
        %s218 = scalar_lea.vmem [#allocation2], %s217
        %s219 = smul.u32 3, %s19
        %p220 = scmp.lt.s32.totalorder %s219, 11
        %s221 = scalar_select %p220, %s219, 11
        %s222 = smul.addr %s221, 8
        %s223 = scalar_lea.vmem %s0, %s222
        %s224 = smul.u32 3, %s19
        %s225 = smul.u32 3, %s19
        %v227 = vld [vmem:[%s223] sm:$0xff]
        %v228 = vld [vmem:[%s223 + $0x8] sm:$0xff]
        %v229 = vld [vmem:[%s223 + $0x10] sm:$0xff]
        %v230 = vpack.c.bf16 %v228, %v227
        %v231 = vpack.c.bf16 %v229, %v229
        %v232 = vld [vmem:[%s1] sm:$0xf]
        %v233 = vld [vmem:[%s1 + $0x4] sm:$0xf]
        %v234 = vld [vmem:[%s1 + $0x8] sm:$0xf]
        %v235 = vld [vmem:[%s1 + $0xc] sm:$0xf]
        %v236 = vld [vmem:[%s2] sm:$0x1]
        %v238 = vperm.slane %v236, 0
        %v244 = vunpack.c.l.b16 %v232
        %v245 = vunpack.c.l.b16 %v233
        %v246 = vunpack.c.l.b16 %v234
        %v247 = vunpack.c.l.b16 %v235
        %v248 = vpack.c.b16 %v245, %v244
        %v249 = vpack.c.b16 %v247, %v246
        %vm252 = vcmask 261120
        %v254 = vsel %vm252, %v230, 0
        %v257 = vsel %vm252, %v231, 0
        %259 = vmatpush.bf16.msra.mxu0 0
        %260 = vmatpush.bf16.msra.mxu0 0
        %261 = vmatpush.bf16.msra.mxu0 0
        %262 = vmatpush.bf16.msra.mxu0 0
        %263 = vmatpush.bf16.msra.mxu0 0
        %264 = vmatpush.bf16.msra.mxu0 0
        %265 = vmatpush.bf16.msra.mxu0 %v249
        %266 = vmatpush.bf16.msra.mxu0 %v248
        %267 = vmatmul.bf16.gmra.mxu0 %v254
        %v268 = vpop.f32.mrf.mxu0
        %v269 = vadd.f32 %v238, %v268
        %v270 = vpop.f32.mrf.mxu0
        %v271 = vadd.f32 %v238, %v270
        %272 = vmatmul.bf16.gmra.mxu0 %v257
        %v273 = vpop.f32.mrf.mxu0
        %v274 = vadd.f32 %v238, %v273
        %v275 = vpop.f32.mrf.mxu0
        %276 = vdwg.mxu0
        %v277 = vmax.f32 %v269, 0.0
        %v278 = vmax.f32 %v271, 0.0
        %v279 = vmax.f32 %v274, 0.0
        %v280 = vpack.c.bf16 %v278, %v277
        %v281 = vpack.c.bf16 %v279, %v279
        %v282 = vld [vmem:[%s3] sm:$0xf]
        %v283 = vld [vmem:[%s3 + $0x4] sm:$0xf]
        %v284 = vld [vmem:[%s3 + $0x8] sm:$0xf]
        %v285 = vld [vmem:[%s3 + $0xc] sm:$0xf]
        %v286 = vld [vmem:[%s3 + $0x10] sm:$0xf]
        %v287 = vld [vmem:[%s3 + $0x14] sm:$0xf]
        %v288 = vld [vmem:[%s3 + $0x18] sm:$0xf]
        %v289 = vld [vmem:[%s3 + $0x1c] sm:$0xf]
        %v290 = vld [vmem:[%s3 + $0x20] sm:$0xf]
        %v291 = vld [vmem:[%s3 + $0x24] sm:$0xf]
        %v292 = vld [vmem:[%s3 + $0x28] sm:$0xf]
        %v293 = vld [vmem:[%s3 + $0x2c] sm:$0xf]
        %v294 = vld [vmem:[%s3 + $0x30] sm:$0xf]
        %v295 = vld [vmem:[%s3 + $0x34] sm:$0xf]
        %v296 = vld [vmem:[%s3 + $0x38] sm:$0xf]
        %v297 = vld [vmem:[%s3 + $0x3c] sm:$0xf]
        %v298 = vld [vmem:[%s4] sm:$0x1]
        %v300 = vperm.slane %v298, 0
        %v318 = vunpack.c.l.b16 %v282
        %v319 = vunpack.c.l.b16 %v283
        %v320 = vunpack.c.l.b16 %v284
        %v321 = vunpack.c.l.b16 %v285
        %v322 = vunpack.c.l.b16 %v286
        %v323 = vunpack.c.l.b16 %v287
        %v324 = vunpack.c.l.b16 %v288
        %v325 = vunpack.c.l.b16 %v289
        %v326 = vunpack.c.l.b16 %v290
        %v327 = vunpack.c.l.b16 %v291
        %v328 = vunpack.c.l.b16 %v292
        %v329 = vunpack.c.l.b16 %v293
        %v330 = vunpack.c.l.b16 %v294
        %v331 = vunpack.c.l.b16 %v295
        %v332 = vunpack.c.l.b16 %v296
        %v333 = vunpack.c.l.b16 %v297
        %v334 = vpack.c.b16 %v319, %v318
        %v335 = vpack.c.b16 %v321, %v320
        %v336 = vpack.c.b16 %v323, %v322
        %v337 = vpack.c.b16 %v325, %v324
        %v338 = vpack.c.b16 %v327, %v326
        %v339 = vpack.c.b16 %v329, %v328
        %v340 = vpack.c.b16 %v331, %v330
        %v341 = vpack.c.b16 %v333, %v332
        %350 = vmatpush.bf16.msra.mxu0 %v341
        %351 = vmatpush.bf16.msra.mxu0 %v340
        %352 = vmatpush.bf16.msra.mxu0 %v339
        %353 = vmatpush.bf16.msra.mxu0 %v338
        %354 = vmatpush.bf16.msra.mxu0 %v337
        %355 = vmatpush.bf16.msra.mxu0 %v336
        %356 = vmatpush.bf16.msra.mxu0 %v335
        %357 = vmatpush.bf16.msra.mxu0 %v334
        %358 = vmatmul.bf16.gmra.mxu0 %v280
        %v359 = vpop.f32.mrf.mxu0
        %v360 = vadd.f32 %v300, %v359
        %v361 = vpop.f32.mrf.mxu0
        %v362 = vadd.f32 %v300, %v361
        %363 = vmatmul.bf16.gmra.mxu0 %v281
        %v364 = vpop.f32.mrf.mxu0
        %v365 = vadd.f32 %v300, %v364
        %v366 = vpop.f32.mrf.mxu0
        %367 = vdwg.mxu0
        %v368 = vpack.c.bf16 %v360, %v360
        %v369 = vpack.c.bf16 %v362, %v362
        %v370 = vpack.c.bf16 %v365, %v365
        %371 = vst [vmem:[%s218] sm:$0xf] %v368
        %372 = vst [vmem:[%s218 + $0x4] sm:$0xf] %v369
        %373 = vst [vmem:[%s218 + $0x8] sm:$0xf] %v370
        %s374 = sand.u32 %s137, 1
        %s375 = scalar_lea.sflag [#allocation3], %s374
        %s376 = sand.u32 %s137, 1
        %s377 = smul.addr %s376, 12
        %s378 = scalar_lea.vmem [#allocation2], %s377
        // Predicated region
        $region41: #{tpu_custom_call.1} parent=39 // pred_check
          %p379 = pneg %p147
        $region42: #{tpu_custom_call.1} parent=39 // pred_check_branch
          %381 = sbr.rel (%p379) target = $region44
        $region43: #{tpu_custom_call.1} parent=39 // pred_region
          %s382 = smul.u32 3, %s19
          %384 = vsyncadd %s375, 0
          %s385 = smul.addr %s382, 4
          %s386 = scalar_lea.hbm %s5, %s385
          %s387 = sshll.u32 %s378, 4
          %s388 = int_to_ptr.vmem [resolvable:$true] %s387
          %s389 = sshll.u32 %s386, 4
          %s390 = int_to_ptr.hbm [resolvable:$true] %s389
          %395 = dma.vmem_to_hbm [thread:$0]  %s388, 192, %s390, %s375, 64, 64, 4
        $region44: #{tpu_custom_call.1} parent=39 // pred_fallthru
          _
      $region40: #{tpu_custom_call.1} parent=5 // pred_fallthru
        _
      %p396 = scmp.le.s32.totalorder 2, %s14
      // Predicated region
      $region45: #{tpu_custom_call.1} parent=5 // pred_check
        %p397 = pneg %p396
      $region46: #{tpu_custom_call.1} parent=5 // pred_check_branch
        %399 = sbr.rel (%p397) target = $region48
      $region47: #{tpu_custom_call.1} parent=5 // pred_region
        %s400 = ssub.s32 %s14, 2
        // Predicated region
        $region49: #{tpu_custom_call.1} parent=47 // pred_check
          %p401 = pneg %p153
        $region50: #{tpu_custom_call.1} parent=47 // pred_check_branch
          %403 = sbr.rel (%p401) target = $region52
        $region51: #{tpu_custom_call.1} parent=47 // pred_region
          %s404 = sand.u32 %s138, 1
          %s405 = scalar_lea.sflag [#allocation3], %s404
          %s406 = sand.u32 %s138, 1
          %s407 = smul.addr %s406, 12
          %s408 = scalar_lea.vmem [#allocation2], %s407
          %410 = dma.done %s405, 192
        $region52: #{tpu_custom_call.1} parent=47 // pred_fallthru
          _
      $region48: #{tpu_custom_call.1} parent=5 // pred_fallthru
        _
    $region6: #{tpu_custom_call.1} parent=1 // loop_footer
      %s18 = sadd.s32 1, %s14
    $region7: #{tpu_custom_call.1} parent=1 // loop_footer_branch
      %13 = sbr.rel target = $region3
    $region8: #{tpu_custom_call.1} parent=1 // loop_exit
      _
    %411 = vsyncpa [#allocation3], 1
    %s412 = scalar_lea.sflag [#allocation3], 1
    %413 = vsyncpa %s412, 1

</llo_original>
